<compile_context>
chip_gen: v5e
topology: v5e:2x2
jax: 0.10.0
libtpu: 0.0.40
codegen_flags: <defaults>
</compile_context>

<pallas_src>
import functools
import math

import jax
import jax.numpy as jnp
from jax.experimental import pallas as pl
from jax.experimental.pallas import tpu as pltpu

_ACC_W = 512              # lane width of the per-class accumulators (review #5)
_MAX_TILE_N = 128 * 1024  # max spatial tile in lanes (~0.5-2 MiB/step, review #1)


def _round_up(x, m):
    return -(-x // m) * m


def _chip_info():
    """(n_cores_per_chip, use_core_parallel, vmem_limit_bytes), generation aware."""
    try:
        kind = jax.devices()[0].device_kind.lower()
    except Exception:
        kind = ""
    try:
        vmem_cap = int(pltpu.get_tpu_info().vmem_capacity_bytes)
    except Exception:
        vmem_cap = 64 * 1024 * 1024            # conservative fallback (v7x per-TC)

    if ("v7" in kind) or ("7x" in kind):
        # v7x: 2 TensorCores/chip, 64 MiB VMEM per TC -> cap well below physical.
        return 2, True, min(44 * 1024 * 1024, (vmem_cap * 3) // 4)
    is_v5e = ("v5e" in kind) or ("v5 lite" in kind) or ("v5lite" in kind)
    if ("v4" in kind) or ("v5p" in kind) or (("v5" in kind) and not is_v5e):
        # v4 / v5p megacore: plain "parallel" grid axes shard across the 2 TCs.
        return 2, False, min(96 * 1024 * 1024, (vmem_cap * 3) // 4)
    # v5e / v6e (and other single-TC devices): no split axis (review #4).
    return 1, False, min(96 * 1024 * 1024, (vmem_cap * 3) // 4)


def _pick_tile_n(N, C, logits_itemsize, tgt_itemsize, n_cores, vmem_budget):
    """Largest _ACC_W-multiple spatial tile fitting the VMEM budget (review #1/#2)."""
    # Per-pixel VMEM: double-buffered inputs + the compiler-managed f32
    # intermediates (x, e, p, g, p*g ~ 5*C rows, plus ~8 single rows for
    # m, s, 1/s, log s, valid, ce_row and fold partials).
    per_px = 2 * (C * logits_itemsize + tgt_itemsize) + (5 * C + 8) * 4
    cap = (vmem_budget // per_px) // _ACC_W * _ACC_W
    cap = max(_ACC_W, min(_MAX_TILE_N, cap))
    need = _round_up(-(-N // n_cores), _ACC_W)     # don't over-tile tiny inputs
    return int(min(cap, need))


def _stats_kernel(logits_ref, tgt_ref, tp_ref, psum_ref, gcnt_ref, ce_ref,
                  *, acc_w, ragged):
    b = pl.program_id(1)
    t = pl.program_id(2)

    @pl.when(jnp.logical_and(b == 0, t == 0))
    def _init():
        tp_ref[...] = jnp.zeros_like(tp_ref)
        psum_ref[...] = jnp.zeros_like(psum_ref)
        gcnt_ref[...] = jnp.zeros_like(gcnt_ref)
        ce_ref[...] = jnp.zeros_like(ce_ref)

    # In-kernel upcasts: HBM streams the narrow native dtypes (bf16 logits,
    # int8/int32 labels).
    x = logits_ref[0].astype(jnp.float32)          # (C, T) logits
    tgt = tgt_ref[0].astype(jnp.int32)             # (1, T) labels
    C, T = x.shape

    if ragged:
        # Padded tail pixels carry the sentinel label C.  Out-of-bounds logits
        # in the ragged last tile may be arbitrary garbage (even NaN/Inf), so
        # neutralize them with one select before the softmax chain (review #8).
        valid_b = tgt < C                          # (1, T) bool
        valid_f = valid_b.astype(jnp.float32)
        x = jnp.where(valid_b, x, 0.0)

    # Softmax over the channel (sublane) axis.
    m = jnp.max(x, axis=0, keepdims=True)          # (1, T)
    xm = x - m                                     # reused for CE (review #7)
    e = jnp.exp(xm)                                # (C, T)  (EUP)
    s = jnp.sum(e, axis=0, keepdims=True)          # (1, T)
    inv_s = pl.reciprocal(s, approx=True)          # EUP slot, not VALU (review #7)
    logs = jnp.log(s)
    if ragged:
        inv_s = inv_s * valid_f                    # masked pixels contribute 0
        logs = logs * valid_f
    p = e * inv_s                                  # (C, T) softmax

    cls = jax.lax.broadcasted_iota(jnp.int32, (C, T), 0)
    g = (cls == tgt).astype(jnp.float32)           # one-hot target (0 on pad)
    pg = p * g                                     # (C, T)
    # CE per pixel: -(log_softmax at target) = log s - (x - m)[target]
    ce_row = logs - jnp.sum(xm * g, axis=0, keepdims=True)   # (1, T)

    def lane_fold(a):
        # (R, T) -> (R, acc_w): pairwise tree of aligned acc_w-lane slices so
        # the 4 VALU slots co-issue instead of a serial latency chain
        # (review #5/#6).  Slices are 512-lane aligned -> no relayout copies.
        parts = [a[:, i * acc_w:(i + 1) * acc_w] for i in range(T // acc_w)]
        while len(parts) > 1:
            nxt = [parts[i] + parts[i + 1] for i in range(0, len(parts) - 1, 2)]
            if len(parts) % 2:
                nxt.append(parts[-1])
            parts = nxt
        return parts[0]

    tp_ref[0] += lane_fold(pg)                     # (C, acc_w)
    psum_ref[0] += lane_fold(p)                    # (C, acc_w)
    gcnt_ref[0] += lane_fold(g)                    # (C, acc_w)
    ce_ref[0] += lane_fold(ce_row)                 # (1, acc_w)


def _region_stats(logits_bcn, target_b1n, *, tile_n, num_splits, ragged,
                  dim0_sem, vmem_limit):
    B, C, _ = logits_bcn.shape
    n_cover = target_b1n.shape[2]                  # padded label length
    tiles_total = n_cover // tile_n
    assert n_cover % tile_n == 0 and tiles_total % num_splits == 0
    tiles_per_split = tiles_total // num_splits
    grid = (num_splits, B, tiles_per_split)

    def in_map(c, b, t):
        return (b, 0, c * tiles_per_split + t)

    acc_c = pl.BlockSpec((1, C, _ACC_W), lambda c, b, t: (c, 0, 0))
    acc_1 = pl.BlockSpec((1, 1, _ACC_W), lambda c, b, t: (c, 0, 0))

    out_shape = (
        jax.ShapeDtypeStruct((num_splits, C, _ACC_W), jnp.float32),   # sum p*g
        jax.ShapeDtypeStruct((num_splits, C, _ACC_W), jnp.float32),   # sum p
        jax.ShapeDtypeStruct((num_splits, C, _ACC_W), jnp.float32),   # sum g
        jax.ShapeDtypeStruct((num_splits, 1, _ACC_W), jnp.float32),   # CE partial
    )

    kernel = functools.partial(_stats_kernel, acc_w=_ACC_W, ragged=ragged)

    return pl.pallas_call(
        kernel,
        out_shape=out_shape,
        grid_spec=pltpu.PrefetchScalarGridSpec(
            num_scalar_prefetch=0,
            grid=grid,
            in_specs=[
                # Default double-buffering; VMEM goes to bigger tiles instead
                # of a third buffer (review #10).
                pl.BlockSpec((1, C, tile_n), in_map),
                pl.BlockSpec((1, 1, tile_n), in_map),
            ],
            out_specs=[acc_c, acc_c, acc_c, acc_1],
        ),
        compiler_params=pltpu.CompilerParams(
            dimension_semantics=(dim0_sem, pltpu.ARBITRARY, pltpu.ARBITRARY),
            vmem_limit_bytes=int(vmem_limit),
        ),
    )(logits_bcn, target_b1n)


@functools.partial(jax.jit,
                   static_argnames=("weight_ce", "weight_tversky", "tile_n"))
def region_tversky_rce_loss(net_output, target, weight_ce=1.0,
                            weight_tversky=1.0, tile_n=None):
    """net_output: (B, C, *spatial) logits; target: (B, 1, *spatial) labels."""
    B, C = net_output.shape[:2]
    N = math.prod(net_output.shape[2:])

    logits = net_output.reshape(B, C, N)            # keep native dtype (bf16 ok)

    # Target stream: keep narrow integer dtypes as-is (int8 callers stream
    # 1 B/px, review #9).  Only convert when a pass over the data is needed
    # anyway (float / int64 targets); forcing int32 -> int8 here would add an
    # extra HBM read+write of the labels and cost more than it saves.
    if (jnp.issubdtype(target.dtype, jnp.integer)
            and jnp.dtype(target.dtype).itemsize <= 4
            and C <= jnp.iinfo(target.dtype).max):
        tgt = target.reshape(B, 1, N)
    else:
        narrow = jnp.int8 if C <= 126 else jnp.int32
        tgt = target.astype(narrow).reshape(B, 1, N)

    n_cores, core_parallel, vmem_limit = _chip_info()
    if tile_n is None:
        tn = _pick_tile_n(N, C, jnp.dtype(logits.dtype).itemsize,
                          jnp.dtype(tgt.dtype).itemsize, n_cores,
                          (vmem_limit * 3) // 4)
    else:
        tn = int(tile_n)
        assert tn % _ACC_W == 0, "tile_n must be a multiple of 512"

    tiles_total = -(-N // tn)
    # Split across TensorCores only when the tile count divides evenly
    # (otherwise fall back to a single sequential pass, review #3/#4).
    num_splits = n_cores if (n_cores > 1 and tiles_total % n_cores == 0) else 1
    cover = tiles_total * tn
    ragged = cover != N

    if ragged:
        # Pad ONLY the tiny label stream with the sentinel class C; the logits
        # stay unpadded and the ragged tail is masked in-kernel (review #8).
        tgt = jnp.pad(tgt, ((0, 0), (0, 0), (0, cover - N)), constant_values=C)
        if tn > N:
            # Single tile wider than the whole array: padding these few logits
            # is negligible and avoids fully-out-of-bounds window reads.
            logits = jnp.pad(logits, ((0, 0), (0, 0), (0, cover - N)))

    if num_splits > 1 and core_parallel:
        dim0_sem = pltpu.CORE_PARALLEL      # v7x: shard the splits across 2 TCs
    elif num_splits > 1:
        dim0_sem = pltpu.PARALLEL           # v4/v5p megacore
    else:
        dim0_sem = pltpu.ARBITRARY

    tp_l, psum_l, gcnt_l, ce_l = _region_stats(
        logits, tgt, tile_n=tn, num_splits=num_splits, ragged=ragged,
        dim0_sem=dim0_sem, vmem_limit=vmem_limit)

    tp = jnp.sum(tp_l, axis=(0, 2))                 # (C,)
    psum = jnp.sum(psum_l, axis=(0, 2))             # (C,)
    gcnt = jnp.sum(gcnt_l, axis=(0, 2))             # (C,)
    ce_sum = jnp.sum(ce_l)

    fp = psum - tp
    fn = gcnt - tp

    # Tversky term (alpha = beta = 0.5, smooth = 1e-5), negative-score style.
    alpha, beta, smooth = 0.5, 0.5, 1e-5
    tversky_index = (tp + smooth) / (tp + alpha * fp + beta * fn + smooth)
    tversky_loss = -jnp.mean(tversky_index)

    # Cross-entropy term (mean over all real pixels).
    ce_loss = ce_sum / jnp.float32(B * N)

    return weight_ce * ce_loss + weight_tversky * tversky_loss


def _reference_loss(net_output, target, weight_ce=1.0, weight_tversky=1.0):
    """Pure-JAX reference with the same semantics (for the self-test)."""
    B, C = net_output.shape[:2]
    N = math.prod(net_output.shape[2:])
    x = net_output.astype(jnp.float32).reshape(B, C, N)
    t = target.astype(jnp.int32).reshape(B, 1, N)
    logp = jax.nn.log_softmax(x, axis=1)
    p = jnp.exp(logp)
    g = (jax.lax.broadcasted_iota(jnp.int32, (B, C, N), 1) == t)
    g = g.astype(jnp.float32)
    tp = jnp.sum(p * g, axis=(0, 2))
    fp = jnp.sum(p * (1.0 - g), axis=(0, 2))
    fn = jnp.sum((1.0 - p) * g, axis=(0, 2))
    smooth = 1e-5
    tversky = -jnp.mean((tp + smooth) / (tp + 0.5 * fp + 0.5 * fn + smooth))
    ce = -jnp.sum(logp * g) / jnp.float32(B * N)
    return weight_ce * ce + weight_tversky * tversky


if __name__ == "__main__":
    key = jax.random.PRNGKey(0)
    k1, k2, k3, k4, k5, k6 = jax.random.split(key, 6)

    # Case 1: f32 logits, int32 labels, spatial size that tiles exactly.
    B, C, H, W = 2, 4, 16, 16
    logits1 = jax.random.normal(k1, (B, C, H, W), dtype=jnp.float32)
    labels1 = jax.random.randint(k2, (B, 1, H, W), 0, C, dtype=jnp.int32)
    out1 = region_tversky_rce_loss(logits1, labels1,
                                   weight_ce=1.0, weight_tversky=1.0)
    jax.block_until_ready(out1)
    ref1 = _reference_loss(logits1, labels1)
    assert out1.shape == () and bool(jnp.isfinite(out1))
    assert abs(float(out1) - float(ref1)) < 2e-3, (float(out1), float(ref1))

    # Case 2: bf16 logits + int8 labels + ragged spatial size (mask path).
    B2, C2, H2, W2 = 2, 4, 20, 20
    logits2 = jax.random.normal(k3, (B2, C2, H2, W2), dtype=jnp.bfloat16)
    labels2 = jax.random.randint(k4, (B2, 1, H2, W2), 0, C2,
                                 dtype=jnp.int32).astype(jnp.int8)
    out2 = region_tversky_rce_loss(logits2, labels2,
                                   weight_ce=1.0, weight_tversky=1.0)
    jax.block_until_ready(out2)
    ref2 = _reference_loss(logits2, labels2)
    assert out2.shape == () and bool(jnp.isfinite(out2))
    assert abs(float(out2) - float(ref2)) < 3e-3, (float(out2), float(ref2))

    # Case 3: small 3D volume (b, c, x, y, z), C=3, non-default weights.
    B3, C3 = 2, 3
    logits3 = jax.random.normal(k5, (B3, C3, 4, 6, 7), dtype=jnp.float32)
    labels3 = jax.random.randint(k6, (B3, 1, 4, 6, 7), 0, C3, dtype=jnp.int32)
    out3 = region_tversky_rce_loss(logits3, labels3,
                                   weight_ce=0.5, weight_tversky=2.0)
    jax.block_until_ready(out3)
    ref3 = _reference_loss(logits3, labels3, weight_ce=0.5, weight_tversky=2.0)
    assert out3.shape == () and bool(jnp.isfinite(out3))
    assert abs(float(out3) - float(ref3)) < 3e-3, (float(out3), float(ref3))

    print("KERNEL_OK")
</pallas_src>

<mosaic_0001>
module attributes {stable_mosaic.version = 11 : i64} {
  func.func @_stats_kernel(%arg0: i32, %arg1: i32, %arg2: i32, %arg3: memref<1x4x512xf32, #tpu.memory_space<vmem>>, %arg4: memref<1x1x512xi32, #tpu.memory_space<vmem>>, %arg5: memref<1x4x512xf32, #tpu.memory_space<vmem>>, %arg6: memref<1x4x512xf32, #tpu.memory_space<vmem>>, %arg7: memref<1x4x512xf32, #tpu.memory_space<vmem>>, %arg8: memref<1x1x512xf32, #tpu.memory_space<vmem>>) attributes {dimension_semantics = [#tpu.dimension_semantics<arbitrary>, #tpu.dimension_semantics<arbitrary>, #tpu.dimension_semantics<arbitrary>], iteration_bounds = array<i64: 1, 2, 1>, scalar_prefetch = 0 : i64, scratch_operands = 0 : i64, tpu.core_type = #tpu.core_type<tc>, window_params = [{transform_indices = @transform_0, window_bounds = array<i64: 1, 4, 512>}, {transform_indices = @transform_1, window_bounds = array<i64: 1, 1, 512>}, {transform_indices = @transform_2, window_bounds = array<i64: 1, 4, 512>}, {transform_indices = @transform_3, window_bounds = array<i64: 1, 4, 512>}, {transform_indices = @transform_4, window_bounds = array<i64: 1, 4, 512>}, {transform_indices = @transform_5, window_bounds = array<i64: 1, 1, 512>}]} {
    %c0_i32 = arith.constant 0 : i32
    %0 = arith.cmpi eq, %arg1, %c0_i32 : i32
    %c0_i32_0 = arith.constant 0 : i32
    %1 = arith.cmpi eq, %arg2, %c0_i32_0 : i32
    %2 = arith.andi %0, %1 : i1
    %3 = arith.extui %2 : i1 to i32
    %c0_i32_1 = arith.constant 0 : i32
    %4 = arith.cmpi ne, %3, %c0_i32_1 : i32
    scf.if %4 {
      %cst_34 = arith.constant 0.000000e+00 : f32
      %64 = vector.broadcast %cst_34 : f32 to vector<1x4x512xf32>
      %c0_35 = arith.constant 0 : index
      %c0_36 = arith.constant 0 : index
      %c0_37 = arith.constant 0 : index
      %65 = vector.load %arg5[%c0_35, %c0_36, %c0_37] : memref<1x4x512xf32, #tpu.memory_space<vmem>>, vector<1x4x512xf32>
      tpu.vector_store %arg5[%c0_35, %c0_36, %c0_37], %64 {strides = array<i32>} : memref<1x4x512xf32, #tpu.memory_space<vmem>>, vector<1x4x512xf32>,
      %cst_38 = arith.constant 0.000000e+00 : f32
      %66 = vector.broadcast %cst_38 : f32 to vector<1x4x512xf32>
      %c0_39 = arith.constant 0 : index
      %c0_40 = arith.constant 0 : index
      %c0_41 = arith.constant 0 : index
      %67 = vector.load %arg6[%c0_39, %c0_40, %c0_41] : memref<1x4x512xf32, #tpu.memory_space<vmem>>, vector<1x4x512xf32>
      tpu.vector_store %arg6[%c0_39, %c0_40, %c0_41], %66 {strides = array<i32>} : memref<1x4x512xf32, #tpu.memory_space<vmem>>, vector<1x4x512xf32>,
      %cst_42 = arith.constant 0.000000e+00 : f32
      %68 = vector.broadcast %cst_42 : f32 to vector<1x4x512xf32>
      %c0_43 = arith.constant 0 : index
      %c0_44 = arith.constant 0 : index
      %c0_45 = arith.constant 0 : index
      %69 = vector.load %arg7[%c0_43, %c0_44, %c0_45] : memref<1x4x512xf32, #tpu.memory_space<vmem>>, vector<1x4x512xf32>
      tpu.vector_store %arg7[%c0_43, %c0_44, %c0_45], %68 {strides = array<i32>} : memref<1x4x512xf32, #tpu.memory_space<vmem>>, vector<1x4x512xf32>,
      %cst_46 = arith.constant 0.000000e+00 : f32
      %70 = vector.broadcast %cst_46 : f32 to vector<1x1x512xf32>
      %c0_47 = arith.constant 0 : index
      %c0_48 = arith.constant 0 : index
      %c0_49 = arith.constant 0 : index
      %71 = vector.load %arg8[%c0_47, %c0_48, %c0_49] : memref<1x1x512xf32, #tpu.memory_space<vmem>>, vector<1x1x512xf32>
      tpu.vector_store %arg8[%c0_47, %c0_48, %c0_49], %70 {strides = array<i32>} : memref<1x1x512xf32, #tpu.memory_space<vmem>>, vector<1x1x512xf32>,
    } else {
    }
    %c0 = arith.constant 0 : index
    %c0_2 = arith.constant 0 : index
    %c0_3 = arith.constant 0 : index
    %5 = vector.load %arg3[%c0, %c0_2, %c0_3] : memref<1x4x512xf32, #tpu.memory_space<vmem>>, vector<1x4x512xf32>
    %6 = vector.shape_cast %5 : vector<1x4x512xf32> to vector<4x512xf32>
    %c0_4 = arith.constant 0 : index
    %c0_5 = arith.constant 0 : index
    %c0_6 = arith.constant 0 : index
    %7 = vector.load %arg4[%c0_4, %c0_5, %c0_6] : memref<1x1x512xi32, #tpu.memory_space<vmem>>, vector<1x1x512xi32>
    %8 = vector.shape_cast %7 : vector<1x1x512xi32> to vector<1x512xi32>
    %c4_i32 = arith.constant 4 : i32
    %9 = vector.broadcast %c4_i32 : i32 to vector<1x512xi32>
    %10 = arith.cmpi slt, %8, %9 : vector<1x512xi32>
    %11 = arith.extui %10 : vector<1x512xi1> to vector<1x512xi32>
    %12 = arith.sitofp %11 : vector<1x512xi32> to vector<1x512xf32>
    %cst = arith.constant 0.000000e+00 : f32
    %13 = vector.shape_cast %10 : vector<1x512xi1> to vector<1x512xi1>
    %14 = vector.broadcast %13 : vector<1x512xi1> to vector<4x512xi1>
    %15 = vector.broadcast %cst : f32 to vector<4x512xf32>
    %16 = arith.select %14, %6, %15 : vector<4x512xi1>, vector<4x512xf32>
    %cst_7 = arith.constant dense<0xFF800000> : vector<512xf32>
    %17 = vector.multi_reduction <maximumf>, %16, %cst_7 [0] : vector<4x512xf32> to vector<512xf32>
    %18 = vector.shape_cast %17 : vector<512xf32> to vector<1x512xf32>
    %19 = vector.broadcast %18 : vector<1x512xf32> to vector<4x512xf32>
    %20 = arith.subf %16, %19 : vector<4x512xf32>
    %21 = math.exp %20 : vector<4x512xf32>
    %cst_8 = arith.constant dense<0.000000e+00> : vector<512xf32>
    %22 = vector.multi_reduction <add>, %21, %cst_8 [0] : vector<4x512xf32> to vector<512xf32>
    %23 = vector.shape_cast %22 : vector<512xf32> to vector<1x512xf32>
    %24 = tpu.reciprocal %23 {approx = true} : vector<1x512xf32> -> vector<1x512xf32>
    %25 = math.log %23 : vector<1x512xf32>
    %26 = arith.mulf %24, %12 : vector<1x512xf32>
    %27 = arith.mulf %25, %12 : vector<1x512xf32>
    %28 = vector.broadcast %26 : vector<1x512xf32> to vector<4x512xf32>
    %29 = arith.mulf %21, %28 : vector<4x512xf32>
    %30 = tpu.iota {dimensions = array<i32: 0>} : vector<4x512xi32>
    %31 = vector.broadcast %8 : vector<1x512xi32> to vector<4x512xi32>
    %32 = arith.cmpi eq, %30, %31 : vector<4x512xi32>
    %33 = arith.extui %32 : vector<4x512xi1> to vector<4x512xi32>
    %34 = arith.sitofp %33 : vector<4x512xi32> to vector<4x512xf32>
    %35 = arith.mulf %29, %34 : vector<4x512xf32>
    %36 = arith.mulf %20, %34 : vector<4x512xf32>
    %cst_9 = arith.constant dense<0.000000e+00> : vector<512xf32>
    %37 = vector.multi_reduction <add>, %36, %cst_9 [0] : vector<4x512xf32> to vector<512xf32>
    %38 = vector.shape_cast %37 : vector<512xf32> to vector<1x512xf32>
    %39 = arith.subf %27, %38 : vector<1x512xf32>
    %c0_10 = arith.constant 0 : index
    %c0_11 = arith.constant 0 : index
    %c0_12 = arith.constant 0 : index
    %40 = vector.load %arg5[%c0_10, %c0_11, %c0_12] : memref<1x4x512xf32, #tpu.memory_space<vmem>>, vector<1x4x512xf32>
    %41 = vector.shape_cast %40 : vector<1x4x512xf32> to vector<4x512xf32>
    %42 = arith.addf %41, %35 : vector<4x512xf32>
    %c0_13 = arith.constant 0 : index
    %c0_14 = arith.constant 0 : index
    %c0_15 = arith.constant 0 : index
    %43 = vector.load %arg5[%c0_13, %c0_14, %c0_15] : memref<1x4x512xf32, #tpu.memory_space<vmem>>, vector<1x4x512xf32>
    %44 = vector.shape_cast %43 : vector<1x4x512xf32> to vector<4x512xf32>
    %45 = vector.shape_cast %42 : vector<4x512xf32> to vector<1x4x512xf32>
    tpu.vector_store %arg5[%c0_13, %c0_14, %c0_15], %45 {strides = array<i32>} : memref<1x4x512xf32, #tpu.memory_space<vmem>>, vector<1x4x512xf32>,
    %c0_16 = arith.constant 0 : index
    %c0_17 = arith.constant 0 : index
    %c0_18 = arith.constant 0 : index
    %46 = vector.load %arg6[%c0_16, %c0_17, %c0_18] : memref<1x4x512xf32, #tpu.memory_space<vmem>>, vector<1x4x512xf32>
    %47 = vector.shape_cast %46 : vector<1x4x512xf32> to vector<4x512xf32>
    %48 = arith.addf %47, %29 : vector<4x512xf32>
    %c0_19 = arith.constant 0 : index
    %c0_20 = arith.constant 0 : index
    %c0_21 = arith.constant 0 : index
    %49 = vector.load %arg6[%c0_19, %c0_20, %c0_21] : memref<1x4x512xf32, #tpu.memory_space<vmem>>, vector<1x4x512xf32>
    %50 = vector.shape_cast %49 : vector<1x4x512xf32> to vector<4x512xf32>
    %51 = vector.shape_cast %48 : vector<4x512xf32> to vector<1x4x512xf32>
    tpu.vector_store %arg6[%c0_19, %c0_20, %c0_21], %51 {strides = array<i32>} : memref<1x4x512xf32, #tpu.memory_space<vmem>>, vector<1x4x512xf32>,
    %c0_22 = arith.constant 0 : index
    %c0_23 = arith.constant 0 : index
    %c0_24 = arith.constant 0 : index
    %52 = vector.load %arg7[%c0_22, %c0_23, %c0_24] : memref<1x4x512xf32, #tpu.memory_space<vmem>>, vector<1x4x512xf32>
    %53 = vector.shape_cast %52 : vector<1x4x512xf32> to vector<4x512xf32>
    %54 = arith.addf %53, %34 : vector<4x512xf32>
    %c0_25 = arith.constant 0 : index
    %c0_26 = arith.constant 0 : index
    %c0_27 = arith.constant 0 : index
    %55 = vector.load %arg7[%c0_25, %c0_26, %c0_27] : memref<1x4x512xf32, #tpu.memory_space<vmem>>, vector<1x4x512xf32>
    %56 = vector.shape_cast %55 : vector<1x4x512xf32> to vector<4x512xf32>
    %57 = vector.shape_cast %54 : vector<4x512xf32> to vector<1x4x512xf32>
    tpu.vector_store %arg7[%c0_25, %c0_26, %c0_27], %57 {strides = array<i32>} : memref<1x4x512xf32, #tpu.memory_space<vmem>>, vector<1x4x512xf32>,
    %c0_28 = arith.constant 0 : index
    %c0_29 = arith.constant 0 : index
    %c0_30 = arith.constant 0 : index
    %58 = vector.load %arg8[%c0_28, %c0_29, %c0_30] : memref<1x1x512xf32, #tpu.memory_space<vmem>>, vector<1x1x512xf32>
    %59 = vector.shape_cast %58 : vector<1x1x512xf32> to vector<1x512xf32>
    %60 = arith.addf %59, %39 : vector<1x512xf32>
    %c0_31 = arith.constant 0 : index
    %c0_32 = arith.constant 0 : index
    %c0_33 = arith.constant 0 : index
    %61 = vector.load %arg8[%c0_31, %c0_32, %c0_33] : memref<1x1x512xf32, #tpu.memory_space<vmem>>, vector<1x1x512xf32>
    %62 = vector.shape_cast %61 : vector<1x1x512xf32> to vector<1x512xf32>
    %63 = vector.shape_cast %60 : vector<1x512xf32> to vector<1x1x512xf32>
    tpu.vector_store %arg8[%c0_31, %c0_32, %c0_33], %63 {strides = array<i32>} : memref<1x1x512xf32, #tpu.memory_space<vmem>>, vector<1x1x512xf32>,
    return
  }
  func.func @transform_0(%arg0: i32, %arg1: i32, %arg2: i32) -> (i32, i32, i32) {
    %c1_i32 = arith.constant 1 : i32
    %0 = arith.muli %arg0, %c1_i32 : i32
    %1 = arith.addi %0, %arg2 : i32
    %c0_i32 = arith.constant 0 : i32
    %c0_i32_0 = arith.constant 0 : i32
    return %arg1, %c0_i32, %1 : i32, i32, i32
  }
  func.func @transform_1(%arg0: i32, %arg1: i32, %arg2: i32) -> (i32, i32, i32) {
    %c1_i32 = arith.constant 1 : i32
    %0 = arith.muli %arg0, %c1_i32 : i32
    %1 = arith.addi %0, %arg2 : i32
    %c0_i32 = arith.constant 0 : i32
    %c0_i32_0 = arith.constant 0 : i32
    return %arg1, %c0_i32, %1 : i32, i32, i32
  }
  func.func @transform_2(%arg0: i32, %arg1: i32, %arg2: i32) -> (i32, i32, i32) {
    %c0_i32 = arith.constant 0 : i32
    %c0_i32_0 = arith.constant 0 : i32
    %c0_i32_1 = arith.constant 0 : i32
    return %arg0, %c0_i32, %c0_i32_0 : i32, i32, i32
  }
  func.func @transform_3(%arg0: i32, %arg1: i32, %arg2: i32) -> (i32, i32, i32) {
    %c0_i32 = arith.constant 0 : i32
    %c0_i32_0 = arith.constant 0 : i32
    %c0_i32_1 = arith.constant 0 : i32
    return %arg0, %c0_i32, %c0_i32_0 : i32, i32, i32
  }
  func.func @transform_4(%arg0: i32, %arg1: i32, %arg2: i32) -> (i32, i32, i32) {
    %c0_i32 = arith.constant 0 : i32
    %c0_i32_0 = arith.constant 0 : i32
    %c0_i32_1 = arith.constant 0 : i32
    return %arg0, %c0_i32, %c0_i32_0 : i32, i32, i32
  }
  func.func @transform_5(%arg0: i32, %arg1: i32, %arg2: i32) -> (i32, i32, i32) {
    %c0_i32 = arith.constant 0 : i32
    %c0_i32_0 = arith.constant 0 : i32
    %c0_i32_1 = arith.constant 0 : i32
    return %arg0, %c0_i32, %c0_i32_0 : i32, i32, i32
  }
}

</mosaic_0001>

<llo_original>
// kernel: region_tversky_rce_loss.1
$region0: #{region_tversky_rce_loss.1}
  #allocation0 [shape = 'u32[]', space=smem, size = 0x4, offset = 0x4, fixed_abs, tag = 'smem constant byte address 0x4 - core index']
  #allocation1 [shape = 'u32[72,128]{1,0:T(1,128)}', space=vmem, size = 0x9000, scoped, tag = 'internal scratch']
  %s0 = inlined_call_operand.vmem [shape: f32[2,4,512], index: 0, kind: input, shape index: {}]
  %s1 = inlined_call_operand.vmem [shape: s32[2,1,512], index: 1, kind: input, shape index: {}]
  %s2 = inlined_call_operand.vmem [shape: f32[1,4,512], index: 2, kind: output, shape index: {0}]
  %s3 = inlined_call_operand.vmem [shape: f32[1,4,512], index: 3, kind: output, shape index: {1}]
  %s4 = inlined_call_operand.vmem [shape: f32[1,4,512], index: 4, kind: output, shape index: {2}]
  %s5 = inlined_call_operand.vmem [shape: f32[1,1,512], index: 5, kind: output, shape index: {3}]
  %6 = xla_tuple %s2, %s3, %s4, %s5
  %s7 = sld [smem:[#allocation0]]
  $region69: #{region_tversky_rce_loss.1} parent=0
    _
  %s9 = ssub.s32 1, %s7
  %s10 = scalar_select 0, %s9, %s7
  loop: start=0, step=1, limit=4
  $region2: #{region_tversky_rce_loss.1} parent=0 // loop_pre_header
    _
  $region3: #{region_tversky_rce_loss.1} parent=0 // loop_header
    %s12 = sphi 0, %s16
    %p13 = scmp.ge.s32.totalorder %s12, 4
    %s19 = sphi 0, %s38
    %s20 = sphi 0, %s34
    %s21 = sphi 0, %s30
    %s22 = sphi 0, %s19
    %s23 = sphi 0, %s20
    %s24 = sphi 0, %s21
    %s25 = sphi 0, %s22
    %s26 = sphi 0, %s23
    %s27 = sphi 0, %s24
    %s45 = sphi 0, %s47
    %s48 = sphi 0, %s45
    %s49 = sphi 0, %s48
    %s65 = sphi 0, %s49
    %s75 = sphi 0, %s77
    %s78 = sphi 0, %s75
    %s79 = sphi 0, %s78
    %s95 = sphi 0, %s79
    %s101 = sphi 0, %s103
    %s104 = sphi 0, %s101
    %s105 = sphi 0, %s104
    %s121 = sphi 0, %s105
    %s127 = sphi 0, %s129
    %s130 = sphi 0, %s127
    %s131 = sphi 0, %s130
    %s147 = sphi 0, %s131
    %s153 = sphi 0, %s155
    %s156 = sphi 0, %s153
    %s157 = sphi 0, %s156
    %s173 = sphi 0, %s157
    %s179 = sphi 0, %s181
    %s182 = sphi 0, %s179
    %s183 = sphi 0, %s182
    %s199 = sphi 0, %s183
  $region4: #{region_tversky_rce_loss.1} parent=0 // loop_header_branch
    %15 = sbr.rel (%p13) target = $region8
  $region5: #{region_tversky_rce_loss.1} parent=0 // loop_body
    %s17 = ssub.s32 %s12, 1
    %s18 = ssub.s32 %s12, 2
    %s28 = sadd.s32 1, %s21
    %p29 = scmp.ge.s32.totalorder %s28, 1
    %s30 = scalar_select %p29, 0, %s28
    %s31 = sadd.s32 1, %s20
    %s32 = scalar_select %p29, %s31, %s20
    %p33 = scmp.ge.s32.totalorder %s32, 2
    %s34 = scalar_select %p33, 0, %s32
    %s35 = sadd.s32 1, %s19
    %s36 = scalar_select %p33, %s35, %s19
    %p37 = scmp.ge.s32.totalorder %s36, 1
    %s38 = scalar_select %p37, 0, %s36
    %s39 = sadd.s32 %s19, %s21
    %s40 = sadd.s32 %s38, %s30
    %s41 = ssub.s32 %s20, %s34
    %s42 = ssub.s32 %s39, %s40
    %s43 = sor.u32 %s41, %s42
    %p44 = scmp.eq.s32.totalorder %s43, 0
    %s46 = sadd.s32 %s45, 1
    %s47 = scalar_select %p44, %s45, %s46
    %p50 = pneg %p44
    %p51 = scmp.eq.s32.totalorder %s12, 1
    %p52 = por %p50, %p51
    %p53 = scmp.ne.s32.totalorder %s45, %s48
    %p54 = scmp.eq.s32.totalorder %s12, 0
    %p55 = por %p53, %p54
    %p56 = scmp.ne.s32.totalorder %s45, %s48
    %p57 = scmp.eq.s32.totalorder %s17, 1
    %p58 = por %p56, %p57
    %p59 = scmp.ne.s32.totalorder %s48, %s49
    %p60 = scmp.eq.s32.totalorder %s17, 0
    %p61 = por %p59, %p60
    %p62 = scmp.ne.s32.totalorder %s48, %s49
    %p63 = scmp.eq.s32.totalorder %s18, 1
    %p64 = por %p62, %p63
    %p66 = scmp.ne.s32.totalorder %s49, %s65
    %p67 = scmp.eq.s32.totalorder %s18, 0
    %p68 = por %p66, %p67
    %s69 = sadd.s32 %s19, %s21
    %s70 = sadd.s32 %s38, %s30
    %s71 = ssub.s32 %s20, %s34
    %s72 = ssub.s32 %s69, %s70
    %s73 = sor.u32 %s71, %s72
    %p74 = scmp.eq.s32.totalorder %s73, 0
    %s76 = sadd.s32 %s75, 1
    %s77 = scalar_select %p74, %s75, %s76
    %p80 = pneg %p74
    %p81 = scmp.eq.s32.totalorder %s12, 1
    %p82 = por %p80, %p81
    %p83 = scmp.ne.s32.totalorder %s75, %s78
    %p84 = scmp.eq.s32.totalorder %s12, 0
    %p85 = por %p83, %p84
    %p86 = scmp.ne.s32.totalorder %s75, %s78
    %p87 = scmp.eq.s32.totalorder %s17, 1
    %p88 = por %p86, %p87
    %p89 = scmp.ne.s32.totalorder %s78, %s79
    %p90 = scmp.eq.s32.totalorder %s17, 0
    %p91 = por %p89, %p90
    %p92 = scmp.ne.s32.totalorder %s78, %s79
    %p93 = scmp.eq.s32.totalorder %s18, 1
    %p94 = por %p92, %p93
    %p96 = scmp.ne.s32.totalorder %s79, %s95
    %p97 = scmp.eq.s32.totalorder %s18, 0
    %p98 = por %p96, %p97
    %s99 = ssub.s32 %s19, %s38
    %p100 = scmp.eq.s32.totalorder %s99, 0
    %s102 = sadd.s32 %s101, 1
    %s103 = scalar_select %p100, %s101, %s102
    %p106 = pneg %p100
    %p107 = scmp.eq.s32.totalorder %s12, 1
    %p108 = por %p106, %p107
    %p109 = scmp.ne.s32.totalorder %s101, %s104
    %p110 = scmp.eq.s32.totalorder %s12, 0
    %p111 = por %p109, %p110
    %p112 = scmp.ne.s32.totalorder %s101, %s104
    %p113 = scmp.eq.s32.totalorder %s17, 1
    %p114 = por %p112, %p113
    %p115 = scmp.ne.s32.totalorder %s104, %s105
    %p116 = scmp.eq.s32.totalorder %s17, 0
    %p117 = por %p115, %p116
    %p118 = scmp.ne.s32.totalorder %s104, %s105
    %p119 = scmp.eq.s32.totalorder %s18, 1
    %p120 = por %p118, %p119
    %p122 = scmp.ne.s32.totalorder %s105, %s121
    %p123 = scmp.eq.s32.totalorder %s18, 0
    %p124 = por %p122, %p123
    %s125 = ssub.s32 %s19, %s38
    %p126 = scmp.eq.s32.totalorder %s125, 0
    %s128 = sadd.s32 %s127, 1
    %s129 = scalar_select %p126, %s127, %s128
    %p132 = pneg %p126
    %p133 = scmp.eq.s32.totalorder %s12, 1
    %p134 = por %p132, %p133
    %p135 = scmp.ne.s32.totalorder %s127, %s130
    %p136 = scmp.eq.s32.totalorder %s12, 0
    %p137 = por %p135, %p136
    %p138 = scmp.ne.s32.totalorder %s127, %s130
    %p139 = scmp.eq.s32.totalorder %s17, 1
    %p140 = por %p138, %p139
    %p141 = scmp.ne.s32.totalorder %s130, %s131
    %p142 = scmp.eq.s32.totalorder %s17, 0
    %p143 = por %p141, %p142
    %p144 = scmp.ne.s32.totalorder %s130, %s131
    %p145 = scmp.eq.s32.totalorder %s18, 1
    %p146 = por %p144, %p145
    %p148 = scmp.ne.s32.totalorder %s131, %s147
    %p149 = scmp.eq.s32.totalorder %s18, 0
    %p150 = por %p148, %p149
    %s151 = ssub.s32 %s19, %s38
    %p152 = scmp.eq.s32.totalorder %s151, 0
    %s154 = sadd.s32 %s153, 1
    %s155 = scalar_select %p152, %s153, %s154
    %p158 = pneg %p152
    %p159 = scmp.eq.s32.totalorder %s12, 1
    %p160 = por %p158, %p159
    %p161 = scmp.ne.s32.totalorder %s153, %s156
    %p162 = scmp.eq.s32.totalorder %s12, 0
    %p163 = por %p161, %p162
    %p164 = scmp.ne.s32.totalorder %s153, %s156
    %p165 = scmp.eq.s32.totalorder %s17, 1
    %p166 = por %p164, %p165
    %p167 = scmp.ne.s32.totalorder %s156, %s157
    %p168 = scmp.eq.s32.totalorder %s17, 0
    %p169 = por %p167, %p168
    %p170 = scmp.ne.s32.totalorder %s156, %s157
    %p171 = scmp.eq.s32.totalorder %s18, 1
    %p172 = por %p170, %p171
    %p174 = scmp.ne.s32.totalorder %s157, %s173
    %p175 = scmp.eq.s32.totalorder %s18, 0
    %p176 = por %p174, %p175
    %s177 = ssub.s32 %s19, %s38
    %p178 = scmp.eq.s32.totalorder %s177, 0
    %s180 = sadd.s32 %s179, 1
    %s181 = scalar_select %p178, %s179, %s180
    %p184 = pneg %p178
    %p185 = scmp.eq.s32.totalorder %s12, 1
    %p186 = por %p184, %p185
    %p187 = scmp.ne.s32.totalorder %s179, %s182
    %p188 = scmp.eq.s32.totalorder %s12, 0
    %p189 = por %p187, %p188
    %p190 = scmp.ne.s32.totalorder %s179, %s182
    %p191 = scmp.eq.s32.totalorder %s17, 1
    %p192 = por %p190, %p191
    %p193 = scmp.ne.s32.totalorder %s182, %s183
    %p194 = scmp.eq.s32.totalorder %s17, 0
    %p195 = por %p193, %p194
    %p196 = scmp.ne.s32.totalorder %s182, %s183
    %p197 = scmp.eq.s32.totalorder %s18, 1
    %p198 = por %p196, %p197
    %p200 = scmp.ne.s32.totalorder %s183, %s199
    %p201 = scmp.eq.s32.totalorder %s18, 0
    %p202 = por %p200, %p201
    %p203 = scmp.le.s32.totalorder 1, %s12
    %p204 = scmp.lt.s32.totalorder %s12, 3
    %p205 = pnand %p203, %p204
    %p206 = pneg %p205
    // Predicated region
    $region9: #{region_tversky_rce_loss.1} parent=5 // pred_check
      _
    $region10: #{region_tversky_rce_loss.1} parent=5 // pred_check_branch
      %208 = sbr.rel (%p205) target = $region12
    $region11: #{region_tversky_rce_loss.1} parent=5 // pred_region
      %s209 = ssub.s32 %s12, 1
    $region12: #{region_tversky_rce_loss.1} parent=5 // pred_fallthru
      _
    %p210 = scmp.lt.s32.totalorder %s12, 2
    // Predicated region
    $region13: #{region_tversky_rce_loss.1} parent=5 // pred_check
      %p211 = pneg %p210
    $region14: #{region_tversky_rce_loss.1} parent=5 // pred_check_branch
      %213 = sbr.rel (%p211) target = $region16
    $region15: #{region_tversky_rce_loss.1} parent=5 // pred_region
      // Predicated region
      $region17: #{region_tversky_rce_loss.1} parent=15 // pred_check
        %p214 = pneg %p55
      $region18: #{region_tversky_rce_loss.1} parent=15 // pred_check_branch
        %216 = sbr.rel (%p214) target = $region20
      $region19: #{region_tversky_rce_loss.1} parent=15 // pred_region
        %s217 = sadd.s32 %s19, %s21
        %s218 = smul.u32 4, %s217
        %p219 = scmp.lt.s32.totalorder %s20, 1
        %s220 = scalar_select %p219, %s20, 1
        %p221 = scmp.lt.s32.totalorder %s218, 3
        %s222 = scalar_select %p221, %s218, 3
        %s223 = smul.addr %s220, 4
        %s224 = sadd.s32 %s222, %s223
        %s225 = smul.addr %s224, 4
        %s226 = scalar_lea.vmem %s0, %s225
        %s227 = sadd.s32 %s19, %s21
        %s228 = smul.u32 4, %s227
      $region20: #{region_tversky_rce_loss.1} parent=15 // pred_fallthru
        _
      // Predicated region
      $region21: #{region_tversky_rce_loss.1} parent=15 // pred_check
        %p229 = pneg %p85
      $region22: #{region_tversky_rce_loss.1} parent=15 // pred_check_branch
        %231 = sbr.rel (%p229) target = $region24
      $region23: #{region_tversky_rce_loss.1} parent=15 // pred_region
        %s232 = sadd.s32 %s19, %s21
        %s233 = smul.u32 4, %s232
        %p234 = scmp.lt.s32.totalorder %s20, 1
        %s235 = scalar_select %p234, %s20, 1
        %p236 = scmp.lt.s32.totalorder %s233, 3
        %s237 = scalar_select %p236, %s233, 3
        %s238 = smul.addr %s235, 4
        %s239 = sadd.s32 %s237, %s238
        %s240 = scalar_lea.vmem %s1, %s239
        %s241 = sadd.s32 %s19, %s21
        %s242 = smul.u32 4, %s241
      $region24: #{region_tversky_rce_loss.1} parent=15 // pred_fallthru
        _
    $region16: #{region_tversky_rce_loss.1} parent=5 // pred_fallthru
      _
    %p243 = scmp.le.s32.totalorder 1, %s12
    %p244 = scmp.lt.s32.totalorder %s12, 3
    %p245 = pnand %p243, %p244
    %p246 = pneg %p245
    // Predicated region
    $region25: #{region_tversky_rce_loss.1} parent=5 // pred_check
      _
    $region26: #{region_tversky_rce_loss.1} parent=5 // pred_check_branch
      %248 = sbr.rel (%p245) target = $region28
    $region27: #{region_tversky_rce_loss.1} parent=5 // pred_region
      %s249 = ssub.s32 %s12, 1
      %s250 = sadd.s32 %s22, %s24
      %s251 = smul.u32 4, %s250
      %p252 = scmp.lt.s32.totalorder %s23, 1
      %s253 = scalar_select %p252, %s23, 1
      %p254 = scmp.lt.s32.totalorder %s251, 3
      %s255 = scalar_select %p254, %s251, 3
      %s256 = smul.addr %s253, 4
      %s257 = sadd.s32 %s255, %s256
      %s258 = smul.addr %s257, 4
      %s259 = scalar_lea.vmem %s0, %s258
      %p260 = pneg %p61
      %p261 = pneg %p58
      %s262 = sadd.s32 %s22, %s24
      %s263 = smul.u32 4, %s262
      %p264 = scmp.lt.s32.totalorder %s23, 1
      %s265 = scalar_select %p264, %s23, 1
      %p266 = scmp.lt.s32.totalorder %s263, 3
      %s267 = scalar_select %p266, %s263, 3
      %s268 = smul.addr %s265, 4
      %s269 = sadd.s32 %s267, %s268
      %s270 = scalar_lea.vmem %s1, %s269
      %p271 = pneg %p91
      %p272 = pneg %p88
      %p273 = pneg %p117
      %p274 = pneg %p114
      %p275 = scmp.lt.s32.totalorder %s22, 0
      %s276 = scalar_select %p275, %s22, 0
      %s277 = smul.addr %s276, 4
      %s278 = smul.addr %s277, 4
      %s279 = scalar_lea.vmem %s2, %s278
      %p280 = pneg %p143
      %p281 = pneg %p140
      %p282 = scmp.lt.s32.totalorder %s22, 0
      %s283 = scalar_select %p282, %s22, 0
      %s284 = smul.addr %s283, 4
      %s285 = smul.addr %s284, 4
      %s286 = scalar_lea.vmem %s3, %s285
      %p287 = pneg %p169
      %p288 = pneg %p166
      %p289 = scmp.lt.s32.totalorder %s22, 0
      %s290 = scalar_select %p289, %s22, 0
      %s291 = smul.addr %s290, 4
      %s292 = smul.addr %s291, 4
      %s293 = scalar_lea.vmem %s4, %s292
      %p294 = pneg %p195
      %p295 = pneg %p192
      %p296 = scmp.lt.s32.totalorder %s22, 0
      %s297 = scalar_select %p296, %s22, 0
      %s298 = smul.addr %s297, 4
      %s299 = scalar_lea.vmem %s5, %s298
      %s300 = sadd.s32 %s22, %s24
      %s301 = smul.u32 4, %s300
      %p302 = scmp.lt.s32.totalorder %s23, 1
      %s303 = scalar_select %p302, %s23, 1
      %p304 = scmp.lt.s32.totalorder %s301, 3
      %s305 = scalar_select %p304, %s301, 3
      %s306 = smul.addr %s303, 4
      %s307 = sadd.s32 %s305, %s306
      %s308 = smul.addr %s307, 4
      %s309 = scalar_lea.vmem %s0, %s308
      %s310 = sadd.s32 %s22, %s24
      %s311 = smul.u32 4, %s310
      %s312 = sadd.s32 %s22, %s24
      %s313 = smul.u32 4, %s312
      %p314 = scmp.lt.s32.totalorder %s23, 1
      %s315 = scalar_select %p314, %s23, 1
      %p316 = scmp.lt.s32.totalorder %s313, 3
      %s317 = scalar_select %p316, %s313, 3
      %s318 = smul.addr %s315, 4
      %s319 = sadd.s32 %s317, %s318
      %s320 = scalar_lea.vmem %s1, %s319
      %s321 = sadd.s32 %s22, %s24
      %s322 = smul.u32 4, %s321
      %p323 = scmp.lt.s32.totalorder %s22, 0
      %s324 = scalar_select %p323, %s22, 0
      %s325 = smul.addr %s324, 4
      %s326 = smul.addr %s325, 4
      %s327 = scalar_lea.vmem %s2, %s326
      %p328 = scmp.lt.s32.totalorder %s22, 0
      %s329 = scalar_select %p328, %s22, 0
      %s330 = smul.addr %s329, 4
      %s331 = smul.addr %s330, 4
      %s332 = scalar_lea.vmem %s3, %s331
      %p333 = scmp.lt.s32.totalorder %s22, 0
      %s334 = scalar_select %p333, %s22, 0
      %s335 = smul.addr %s334, 4
      %s336 = smul.addr %s335, 4
      %s337 = scalar_lea.vmem %s4, %s336
      %p338 = scmp.lt.s32.totalorder %s22, 0
      %s339 = scalar_select %p338, %s22, 0
      %s340 = smul.addr %s339, 4
      %s341 = scalar_lea.vmem %s5, %s340
      %p342 = scmp.eq.s32.totalorder %s23, 0
      %p343 = scmp.eq.s32.totalorder %s24, 0
      %p344 = pnand %p342, %p343
      %p345 = pneg %p344
      // Predicated region
      $region29: #{region_tversky_rce_loss.1} parent=27 // pred_check
        _
      $region30: #{region_tversky_rce_loss.1} parent=27 // pred_check_branch
        %347 = sbr.rel (%p344) target = $region32
      $region31: #{region_tversky_rce_loss.1} parent=27 // pred_region
        %348 = vst [vmem:[%s327] sm:$0xff] 0.0
        %349 = vst [vmem:[%s327 + $0x8] sm:$0xff] 0.0
        %350 = vst [vmem:[%s332] sm:$0xff] 0.0
        %351 = vst [vmem:[%s332 + $0x8] sm:$0xff] 0.0
        %352 = vst [vmem:[%s337] sm:$0xff] 0.0
        %353 = vst [vmem:[%s337 + $0x8] sm:$0xff] 0.0
        %v354 = vlaneseq
        %vm355 = vcmp.ge.s32.totalorder %v354, 0
        %vm356 = vcmp.lt.s32.totalorder %v354, 512
        %vm357 = vmand %vm355, %vm356
        %358 = vst.msk [vmem:[%s341] sm:$0xf] %vm357, 0.0
      $region32: #{region_tversky_rce_loss.1} parent=27 // pred_fallthru
        _
      %v359 = vld [vmem:[%s309] sm:$0xff]
      %v360 = vld [vmem:[%s309 + $0x8] sm:$0xff]
      %v361 = vld [vmem:[%s320] sm:$0xf]
      %vm362 = vcmp.lt.s32.totalorder %v361, 4
      %v363 = vsel %vm362, 1, 0
      %v364 = vcvt.s32.f32 %v363
      %v365 = vperm.slane %v363, 0
      %v366 = vperm.slane %v363, 1
      %v367 = vperm.slane %v363, 2
      %v368 = vperm.slane %v363, 3
      %vm369 = vcmp.eq.s32.totalorder %v365, 1
      %vm370 = vcmp.eq.s32.totalorder %v366, 1
      %vm371 = vcmp.eq.s32.totalorder %v367, 1
      %vm372 = vcmp.eq.s32.totalorder %v368, 1
      %375 = vst [vmem:[#allocation1] ss:$2 sm:$0xff] %v359
      %s376 = scalar_lea.vmem [#allocation1], 16
      %377 = vst [vmem:[%s376] ss:$2 sm:$0xff] %v360
      %v378 = vld.sshfl [vmem:[#allocation1] sm:$0xff pattern:$0x75316420]
      %v379 = vld.sshfl [vmem:[#allocation1 + $0x8] sm:$0xff pattern:$0x75316420]
      %v380 = vld.sshfl [vmem:[#allocation1 + $0x10] sm:$0xff pattern:$0x75316420]
      %v381 = vld.sshfl [vmem:[#allocation1 + $0x18] sm:$0xff pattern:$0x75316420]
      %v386 = vsel %vm369, %v378, 0.0
      %v387 = vsel %vm370, %v379, 0.0
      %v388 = vsel %vm371, %v380, 0.0
      %v389 = vsel %vm372, %v381, 0.0
      %vm390 = vcmask 1043456
      %v391 = vsel %vm390, %v386, -inf
      %v392 = vrot.slane %v391, 4
      %v393 = vmax.f32 %v391, %v392
      %v394 = vrot.slane %v393, 2
      %v395 = vmax.f32 %v393, %v394
      %v396 = vrot.slane %v395, 1
      %v397 = vmax.f32 %v395, %v396
      %v398 = vsel %vm390, %v387, -inf
      %v399 = vrot.slane %v398, 4
      %v400 = vmax.f32 %v398, %v399
      %v401 = vrot.slane %v400, 2
      %v402 = vmax.f32 %v400, %v401
      %v403 = vrot.slane %v402, 1
      %v404 = vmax.f32 %v402, %v403
      %v405 = vsel %vm390, %v388, -inf
      %v406 = vrot.slane %v405, 4
      %v407 = vmax.f32 %v405, %v406
      %v408 = vrot.slane %v407, 2
      %v409 = vmax.f32 %v407, %v408
      %v410 = vrot.slane %v409, 1
      %v411 = vmax.f32 %v409, %v410
      %v412 = vsel %vm390, %v389, -inf
      %v413 = vrot.slane %v412, 4
      %v414 = vmax.f32 %v412, %v413
      %v415 = vrot.slane %v414, 2
      %v416 = vmax.f32 %v414, %v415
      %v417 = vrot.slane %v416, 1
      %v418 = vmax.f32 %v416, %v417
      %v419 = vsub.f32 %v386, %v397
      %v420 = vsub.f32 %v387, %v404
      %v421 = vsub.f32 %v388, %v411
      %v422 = vsub.f32 %v389, %v418
      %v423 = vmul.f32 %v419, 1.442695
      %v424 = vpow.pop %v423
      %v425 = vmul.f32 %v420, 1.442695
      %v426 = vpow.pop %v425
      %v427 = vmul.f32 %v421, 1.442695
      %v428 = vpow.pop %v427
      %v429 = vmul.f32 %v422, 1.442695
      %v430 = vpow.pop %v429
      %v431 = vsel %vm390, %v424, 0.0
      %v432 = vrot.slane %v431, 4
      %v433 = vadd.f32 %v431, %v432
      %v434 = vrot.slane %v433, 2
      %v435 = vadd.f32 %v433, %v434
      %v436 = vrot.slane %v435, 1
      %v437 = vadd.f32 %v435, %v436
      %v438 = vsel %vm390, %v426, 0.0
      %v439 = vrot.slane %v438, 4
      %v440 = vadd.f32 %v438, %v439
      %v441 = vrot.slane %v440, 2
      %v442 = vadd.f32 %v440, %v441
      %v443 = vrot.slane %v442, 1
      %v444 = vadd.f32 %v442, %v443
      %v445 = vsel %vm390, %v428, 0.0
      %v446 = vrot.slane %v445, 4
      %v447 = vadd.f32 %v445, %v446
      %v448 = vrot.slane %v447, 2
      %v449 = vadd.f32 %v447, %v448
      %v450 = vrot.slane %v449, 1
      %v451 = vadd.f32 %v449, %v450
      %v452 = vsel %vm390, %v430, 0.0
      %v453 = vrot.slane %v452, 4
      %v454 = vadd.f32 %v452, %v453
      %v455 = vrot.slane %v454, 2
      %v456 = vadd.f32 %v454, %v455
      %v457 = vrot.slane %v456, 1
      %v458 = vadd.f32 %v456, %v457
      %v459 = vrcp.pop %v437
      %v460 = vrcp.pop %v444
      %v461 = vrcp.pop %v451
      %v462 = vrcp.pop %v458
      %v463 = vlog2.pop %v437
      %v464 = vmul.f32 %v463, 0.6931472
      %v465 = vlog2.pop %v444
      %v466 = vmul.f32 %v465, 0.6931472
      %v467 = vlog2.pop %v451
      %v468 = vmul.f32 %v467, 0.6931472
      %v469 = vlog2.pop %v458
      %v470 = vmul.f32 %v469, 0.6931472
      %v472 = vperm.slane %v364, 0
      %v473 = vperm.slane %v364, 1
      %v474 = vperm.slane %v364, 2
      %v475 = vperm.slane %v364, 3
      %v480 = vmul.f32 %v459, %v472
      %v481 = vmul.f32 %v460, %v473
      %v482 = vmul.f32 %v461, %v474
      %v483 = vmul.f32 %v462, %v475
      %v484 = vmul.f32 %v464, %v472
      %v485 = vmul.f32 %v466, %v473
      %v486 = vmul.f32 %v468, %v474
      %v487 = vmul.f32 %v470, %v475
      %v488 = vperm.slane %v480, 0
      %v489 = vperm.slane %v481, 0
      %v490 = vperm.slane %v482, 0
      %v491 = vperm.slane %v483, 0
      %v492 = vmul.f32 %v424, %v488
      %v493 = vmul.f32 %v426, %v489
      %v494 = vmul.f32 %v428, %v490
      %v495 = vmul.f32 %v430, %v491
      %v496 = vlaneseq
      %v497 = vshrl.u32 %v496, 7
      %v498 = vperm.slane %v361, 0
      %v499 = vperm.slane %v361, 1
      %v500 = vperm.slane %v361, 2
      %v501 = vperm.slane %v361, 3
      %vm502 = vcmp.eq.s32.totalorder %v497, %v498
      %vm503 = vcmp.eq.s32.totalorder %v497, %v499
      %vm504 = vcmp.eq.s32.totalorder %v497, %v500
      %vm505 = vcmp.eq.s32.totalorder %v497, %v501
      %v506 = vsel %vm502, 1, 0
      %v507 = vsel %vm503, 1, 0
      %v508 = vsel %vm504, 1, 0
      %v509 = vsel %vm505, 1, 0
      %v510 = vcvt.s32.f32 %v506
      %v511 = vcvt.s32.f32 %v507
      %v512 = vcvt.s32.f32 %v508
      %v513 = vcvt.s32.f32 %v509
      %v514 = vmul.f32 %v492, %v510
      %v515 = vmul.f32 %v493, %v511
      %v516 = vmul.f32 %v494, %v512
      %v517 = vmul.f32 %v495, %v513
      %v518 = vmul.f32 %v419, %v510
      %v519 = vmul.f32 %v420, %v511
      %v520 = vmul.f32 %v421, %v512
      %v521 = vmul.f32 %v422, %v513
      %v522 = vsel %vm390, %v518, 0.0
      %v523 = vrot.slane %v522, 4
      %v524 = vadd.f32 %v522, %v523
      %v525 = vrot.slane %v524, 2
      %v526 = vadd.f32 %v524, %v525
      %v527 = vrot.slane %v526, 1
      %v528 = vadd.f32 %v526, %v527
      %v529 = vsel %vm390, %v519, 0.0
      %v530 = vrot.slane %v529, 4
      %v531 = vadd.f32 %v529, %v530
      %v532 = vrot.slane %v531, 2
      %v533 = vadd.f32 %v531, %v532
      %v534 = vrot.slane %v533, 1
      %v535 = vadd.f32 %v533, %v534
      %v536 = vsel %vm390, %v520, 0.0
      %v537 = vrot.slane %v536, 4
      %v538 = vadd.f32 %v536, %v537
      %v539 = vrot.slane %v538, 2
      %v540 = vadd.f32 %v538, %v539
      %v541 = vrot.slane %v540, 1
      %v542 = vadd.f32 %v540, %v541
      %v543 = vsel %vm390, %v521, 0.0
      %v544 = vrot.slane %v543, 4
      %v545 = vadd.f32 %v543, %v544
      %v546 = vrot.slane %v545, 2
      %v547 = vadd.f32 %v545, %v546
      %v548 = vrot.slane %v547, 1
      %v549 = vadd.f32 %v547, %v548
      %v550 = vsub.f32 %v484, %v528
      %v551 = vsub.f32 %v485, %v535
      %v552 = vsub.f32 %v486, %v542
      %v553 = vsub.f32 %v487, %v549
      %v554 = vld [vmem:[%s327] sm:$0xff]
      %v555 = vld [vmem:[%s327 + $0x8] sm:$0xff]
      %v560 = vrot.slane %v515, 4
      %v561 = vrot.slane %v517, 4
      %v562 = vsel %vm390, %v514, %v560
      %v563 = vsel %vm390, %v516, %v561
      %v566 = vadd.f32 %v554, %v562
      %v567 = vadd.f32 %v555, %v563
      %568 = vst [vmem:[%s327] sm:$0xff] %v566
      %569 = vst [vmem:[%s327 + $0x8] sm:$0xff] %v567
      %v570 = vld [vmem:[%s332] sm:$0xff]
      %v571 = vld [vmem:[%s332 + $0x8] sm:$0xff]
      %v576 = vrot.slane %v493, 4
      %v577 = vrot.slane %v495, 4
      %v578 = vsel %vm390, %v492, %v576
      %v579 = vsel %vm390, %v494, %v577
      %v582 = vadd.f32 %v570, %v578
      %v583 = vadd.f32 %v571, %v579
      %584 = vst [vmem:[%s332] sm:$0xff] %v582
      %585 = vst [vmem:[%s332 + $0x8] sm:$0xff] %v583
      %v586 = vld [vmem:[%s337] sm:$0xff]
      %v587 = vld [vmem:[%s337 + $0x8] sm:$0xff]
      %v592 = vrot.slane %v511, 4
      %v593 = vrot.slane %v513, 4
      %v594 = vsel %vm390, %v510, %v592
      %v595 = vsel %vm390, %v512, %v593
      %v598 = vadd.f32 %v586, %v594
      %v599 = vadd.f32 %v587, %v595
      %600 = vst [vmem:[%s337] sm:$0xff] %v598
      %601 = vst [vmem:[%s337 + $0x8] sm:$0xff] %v599
      %v602 = vld [vmem:[%s341] sm:$0xf]
      %v607 = vrot.slane %v551, 7
      %v608 = vrot.slane %v552, 6
      %v609 = vrot.slane %v553, 5
      %vm610 = vcmask 1040384
      %v611 = vsel %vm610, %v550, %v607
      %vm612 = vcmask 1042434
      %v613 = vsel %vm612, %v608, %v609
      %vm614 = vcmask 1041408
      %v615 = vsel %vm614, %v611, %v613
      %v617 = vadd.f32 %v602, %v615
      %v618 = vlaneseq
      %vm619 = vcmp.ge.s32.totalorder %v618, 0
      %vm620 = vcmp.lt.s32.totalorder %v618, 512
      %vm621 = vmand %vm619, %vm620
      %622 = vst.msk [vmem:[%s341] sm:$0xf] %vm621, %v617
      %p623 = scmp.lt.s32.totalorder %s22, 0
      %s624 = scalar_select %p623, %s22, 0
      %s625 = smul.addr %s624, 4
      %s626 = smul.addr %s625, 4
      %s627 = scalar_lea.vmem %s2, %s626
      %p628 = scmp.lt.s32.totalorder %s22, 0
      %s629 = scalar_select %p628, %s22, 0
      %s630 = smul.addr %s629, 4
      %s631 = smul.addr %s630, 4
      %s632 = scalar_lea.vmem %s3, %s631
      %p633 = scmp.lt.s32.totalorder %s22, 0
      %s634 = scalar_select %p633, %s22, 0
      %s635 = smul.addr %s634, 4
      %s636 = smul.addr %s635, 4
      %s637 = scalar_lea.vmem %s4, %s636
      %p638 = scmp.lt.s32.totalorder %s22, 0
      %s639 = scalar_select %p638, %s22, 0
      %s640 = smul.addr %s639, 4
      %s641 = scalar_lea.vmem %s5, %s640
      // Predicated region
      $region33: #{region_tversky_rce_loss.1} parent=27 // pred_check
        %p642 = pneg %p114
      $region34: #{region_tversky_rce_loss.1} parent=27 // pred_check_branch
        %644 = sbr.rel (%p642) target = $region36
      $region35: #{region_tversky_rce_loss.1} parent=27 // pred_region
        _
      $region36: #{region_tversky_rce_loss.1} parent=27 // pred_fallthru
        _
      // Predicated region
      $region37: #{region_tversky_rce_loss.1} parent=27 // pred_check
        %p645 = pneg %p140
      $region38: #{region_tversky_rce_loss.1} parent=27 // pred_check_branch
        %647 = sbr.rel (%p645) target = $region40
      $region39: #{region_tversky_rce_loss.1} parent=27 // pred_region
        _
      $region40: #{region_tversky_rce_loss.1} parent=27 // pred_fallthru
        _
      // Predicated region
      $region41: #{region_tversky_rce_loss.1} parent=27 // pred_check
        %p648 = pneg %p166
      $region42: #{region_tversky_rce_loss.1} parent=27 // pred_check_branch
        %650 = sbr.rel (%p648) target = $region44
      $region43: #{region_tversky_rce_loss.1} parent=27 // pred_region
        _
      $region44: #{region_tversky_rce_loss.1} parent=27 // pred_fallthru
        _
      // Predicated region
      $region45: #{region_tversky_rce_loss.1} parent=27 // pred_check
        %p651 = pneg %p192
      $region46: #{region_tversky_rce_loss.1} parent=27 // pred_check_branch
        %653 = sbr.rel (%p651) target = $region48
      $region47: #{region_tversky_rce_loss.1} parent=27 // pred_region
        _
      $region48: #{region_tversky_rce_loss.1} parent=27 // pred_fallthru
        _
      // Predicated region
      $region49: #{region_tversky_rce_loss.1} parent=27 // pred_check
        %p654 = pneg %p114
      $region50: #{region_tversky_rce_loss.1} parent=27 // pred_check_branch
        %656 = sbr.rel (%p654) target = $region52
      $region51: #{region_tversky_rce_loss.1} parent=27 // pred_region
        %p657 = scmp.lt.s32.totalorder %s22, 0
        %s658 = scalar_select %p657, %s22, 0
        %s659 = smul.addr %s658, 4
        %s660 = smul.addr %s659, 4
        %s661 = scalar_lea.vmem %s2, %s660
      $region52: #{region_tversky_rce_loss.1} parent=27 // pred_fallthru
        _
      // Predicated region
      $region53: #{region_tversky_rce_loss.1} parent=27 // pred_check
        %p662 = pneg %p140
      $region54: #{region_tversky_rce_loss.1} parent=27 // pred_check_branch
        %664 = sbr.rel (%p662) target = $region56
      $region55: #{region_tversky_rce_loss.1} parent=27 // pred_region
        %p665 = scmp.lt.s32.totalorder %s22, 0
        %s666 = scalar_select %p665, %s22, 0
        %s667 = smul.addr %s666, 4
        %s668 = smul.addr %s667, 4
        %s669 = scalar_lea.vmem %s3, %s668
      $region56: #{region_tversky_rce_loss.1} parent=27 // pred_fallthru
        _
      // Predicated region
      $region57: #{region_tversky_rce_loss.1} parent=27 // pred_check
        %p670 = pneg %p166
      $region58: #{region_tversky_rce_loss.1} parent=27 // pred_check_branch
        %672 = sbr.rel (%p670) target = $region60
      $region59: #{region_tversky_rce_loss.1} parent=27 // pred_region
        %p673 = scmp.lt.s32.totalorder %s22, 0
        %s674 = scalar_select %p673, %s22, 0
        %s675 = smul.addr %s674, 4
        %s676 = smul.addr %s675, 4
        %s677 = scalar_lea.vmem %s4, %s676
      $region60: #{region_tversky_rce_loss.1} parent=27 // pred_fallthru
        _
      // Predicated region
      $region61: #{region_tversky_rce_loss.1} parent=27 // pred_check
        %p678 = pneg %p192
      $region62: #{region_tversky_rce_loss.1} parent=27 // pred_check_branch
        %680 = sbr.rel (%p678) target = $region64
      $region63: #{region_tversky_rce_loss.1} parent=27 // pred_region
        %p681 = scmp.lt.s32.totalorder %s22, 0
        %s682 = scalar_select %p681, %s22, 0
        %s683 = smul.addr %s682, 4
        %s684 = scalar_lea.vmem %s5, %s683
      $region64: #{region_tversky_rce_loss.1} parent=27 // pred_fallthru
        _
    $region28: #{region_tversky_rce_loss.1} parent=5 // pred_fallthru
      _
    %p685 = scmp.le.s32.totalorder 2, %s12
    // Predicated region
    $region65: #{region_tversky_rce_loss.1} parent=5 // pred_check
      %p686 = pneg %p685
    $region66: #{region_tversky_rce_loss.1} parent=5 // pred_check_branch
      %688 = sbr.rel (%p686) target = $region68
    $region67: #{region_tversky_rce_loss.1} parent=5 // pred_region
      %s689 = ssub.s32 %s12, 2
    $region68: #{region_tversky_rce_loss.1} parent=5 // pred_fallthru
      _
  $region6: #{region_tversky_rce_loss.1} parent=0 // loop_footer
    %s16 = sadd.s32 1, %s12
  $region7: #{region_tversky_rce_loss.1} parent=0 // loop_footer_branch
    %11 = sbr.rel target = $region3
  $region8: #{region_tversky_rce_loss.1} parent=0 // loop_exit
    _

</llo_original>
